<compile_context>
chip_gen: v5e
topology: v5e:2x2
jax: 0.10.0
libtpu: 0.0.40
codegen_flags: <defaults>
</compile_context>

<pallas_src>
import functools

import jax
import jax.numpy as jnp
from jax.experimental import pallas as pl
from jax.experimental.pallas import tpu as pltpu

_LANE = 128
_MAX_TILE_ROWS = 8192   # 8192 * 128 * 4 B = 4 MiB per f32 input block
_NUM_CORES = 2          # leading "parallel" grid axis (dual-TC on v7x)


def _charbonnier_kernel(x_ref, y_ref, out_ref, acc_ref, *,
                        eps2, n_valid, tile_rows, lane,
                        steps_per_core, num_blocks, need_mask):
    c = pl.program_id(0)   # "parallel" core axis
    j = pl.program_id(1)   # "arbitrary" sequential axis within a core

    @pl.when(j == 0)
    def _():
        acc_ref[...] = jnp.zeros_like(acc_ref)

    d = x_ref[...].astype(jnp.float32) - y_ref[...].astype(jnp.float32)
    v = jnp.sqrt(d * d + jnp.float32(eps2))

    def _accumulate(vals):
        # Lane-parallel accumulation: reduce only the row-tile axis down to a
        # vreg-shaped (8, lane) partial held in VMEM across the grid.
        pad_rows = (-tile_rows) % 8
        if pad_rows:   # only possible for tiny (<8 row) inputs
            vals = jnp.concatenate(
                [vals, jnp.zeros((pad_rows, lane), jnp.float32)], axis=0)
        acc_ref[...] += jnp.sum(vals.reshape(-1, 8, lane), axis=0)

    if need_mask:
        # Only the last logical block (and the clamped phantom block, if any)
        # can contain invalid elements; all other steps skip the mask work.
        block = c * steps_per_core + j            # unclamped logical block id
        boundary = block >= (num_blocks - 1)

        @pl.when(boundary)
        def _():
            flat = (block * (tile_rows * lane)
                    + jax.lax.broadcasted_iota(
                        jnp.int32, (tile_rows, lane), 0) * lane
                    + jax.lax.broadcasted_iota(
                        jnp.int32, (tile_rows, lane), 1))
            # select (not multiply-by-mask): garbage/NaN in OOB rows is safe.
            _accumulate(jnp.where(flat < n_valid, v, jnp.float32(0.0)))

        @pl.when(jnp.logical_not(boundary))
        def _():
            _accumulate(v)
    else:
        _accumulate(v)

    @pl.when(j == pl.num_programs(1) - 1)
    def _():
        out_ref[...] = acc_ref[...]


def charbonnier_loss(x, y, eps=1e-3):
    """Pallas implementation of CharbonnierLoss.forward (scalar mean loss)."""
    assert x.shape == y.shape, "x and y must have identical shapes"
    n = int(x.size)
    assert n > 0
    eps = float(eps)

    x_flat = jnp.ravel(x)
    y_flat = jnp.ravel(y)

    rows = pl.cdiv(n, _LANE)
    padded_n = rows * _LANE
    if padded_n != n:
        # One small pad copy only when n % 128 != 0; the padded elements are
        # masked out in-kernel, so their values never matter.
        # TODO(synk): a fully copy-free ragged path needs 1-D block specs or
        # allow_input_fusion; kept the 2-D lane-dense layout instead.
        x_flat = jnp.pad(x_flat, (0, padded_n - n))
        y_flat = jnp.pad(y_flat, (0, padded_n - n))
    x2 = x_flat.reshape(rows, _LANE)
    y2 = y_flat.reshape(rows, _LANE)

    # Tile selection: largest lane-dense block (cap 4 MiB/input in f32) that
    # keeps the double-buffered footprint well under 32 MiB and still gives
    # both cores of the leading parallel axis work when the input is big
    # enough to split.
    if rows <= 8:
        tile_rows = rows
    else:
        half_rows = (rows + 1) // 2
        tile_rows = min(_MAX_TILE_ROWS, ((half_rows + 7) // 8) * 8)

    num_blocks = pl.cdiv(rows, tile_rows)
    steps_per_core = (num_blocks + _NUM_CORES - 1) // _NUM_CORES
    covered = _NUM_CORES * steps_per_core * tile_rows * _LANE
    need_mask = covered != n

    kernel = functools.partial(
        _charbonnier_kernel,
        eps2=eps * eps, n_valid=n, tile_rows=tile_rows, lane=_LANE,
        steps_per_core=steps_per_core, num_blocks=num_blocks,
        need_mask=need_mask)

    def in_map(c, j):
        # Clamp so the (at most one) phantom trailing step on the last core
        # re-reads the final in-bounds block; its contribution is masked away.
        return (jnp.minimum(c * steps_per_core + j, num_blocks - 1), 0)

    itemsize = int(jnp.dtype(x.dtype).itemsize)
    partials = pl.pallas_call(
        kernel,
        out_shape=jax.ShapeDtypeStruct((_NUM_CORES * 8, _LANE), jnp.float32),
        grid_spec=pltpu.PrefetchScalarGridSpec(
            num_scalar_prefetch=0,
            grid=(_NUM_CORES, steps_per_core),
            in_specs=[
                pl.BlockSpec((tile_rows, _LANE), in_map),
                pl.BlockSpec((tile_rows, _LANE), in_map),
            ],
            out_specs=pl.BlockSpec((8, _LANE), lambda c, j: (c, 0)),
            scratch_shapes=[pltpu.VMEM((8, _LANE), jnp.float32)],
        ),
        compiler_params=pltpu.CompilerParams(
            dimension_semantics=("parallel", "arbitrary"),
            vmem_limit_bytes=32 * 1024 * 1024,
        ),
        cost_estimate=pl.CostEstimate(
            flops=4 * padded_n,
            transcendentals=padded_n,
            bytes_accessed=2 * padded_n * itemsize
            + _NUM_CORES * 8 * _LANE * 4,
        ),
    )(x2, y2)

    total = jnp.sum(partials)
    return (total / jnp.float32(n)).astype(x.dtype)


def _reference(x, y, eps=1e-3):
    d = x.astype(jnp.float32) - y.astype(jnp.float32)
    return jnp.mean(jnp.sqrt(d * d + eps * eps)).astype(x.dtype)


if __name__ == "__main__":
    key = jax.random.PRNGKey(0)
    kx, ky = jax.random.split(key)

    # Primary check: NCHW image-restoration style inputs (n % 128 == 0 path).
    x = jax.random.normal(kx, (2, 4, 16, 16), dtype=jnp.float32)
    y = jax.random.normal(ky, (2, 4, 16, 16), dtype=jnp.float32)
    loss = jax.block_until_ready(charbonnier_loss(x, y, eps=1e-3))
    ref = _reference(x, y, eps=1e-3)
    assert jnp.allclose(loss, ref, rtol=1e-5, atol=1e-6), (loss, ref)

    # Secondary checks: ragged element counts exercise the masked path.
    for shape in [(2, 3, 50, 50), (3, 5, 7)]:
        ka, kb = jax.random.split(jax.random.PRNGKey(1), 2)
        xa = jax.random.normal(ka, shape, dtype=jnp.float32)
        yb = jax.random.normal(kb, shape, dtype=jnp.float32)
        got = jax.block_until_ready(charbonnier_loss(xa, yb, eps=1e-3))
        want = _reference(xa, yb, eps=1e-3)
        assert jnp.allclose(got, want, rtol=1e-5, atol=1e-6), (shape, got, want)

    print("KERNEL_OK")
</pallas_src>

<mosaic_0001>
module attributes {stable_mosaic.version = 11 : i64} {
  func.func @_charbonnier_kernel(%arg0: i32, %arg1: i32, %arg2: memref<8x128xf32, #tpu.memory_space<vmem>>, %arg3: memref<8x128xf32, #tpu.memory_space<vmem>>, %arg4: memref<8x128xf32, #tpu.memory_space<vmem>>, %arg5: memref<8x128xf32, #tpu.memory_space<vmem>>) attributes {dimension_semantics = [#tpu.dimension_semantics<parallel>, #tpu.dimension_semantics<arbitrary>], iteration_bounds = array<i64: 2, 1>, scalar_prefetch = 0 : i64, scratch_operands = 1 : i64, tpu.core_type = #tpu.core_type<tc>, window_params = [{transform_indices = @transform_0, window_bounds = array<i64: 8, 128>}, {transform_indices = @transform_1, window_bounds = array<i64: 8, 128>}, {transform_indices = @transform_2, window_bounds = array<i64: 8, 128>}]} {
    %c0_i32 = arith.constant 0 : i32
    %0 = arith.cmpi eq, %arg1, %c0_i32 : i32
    %1 = arith.extui %0 : i1 to i32
    %c0_i32_0 = arith.constant 0 : i32
    %2 = arith.cmpi ne, %1, %c0_i32_0 : i32
    scf.if %2 {
      %cst_11 = arith.constant 0.000000e+00 : f32
      %18 = vector.broadcast %cst_11 : f32 to vector<8x128xf32>
      %c0_12 = arith.constant 0 : index
      %c0_13 = arith.constant 0 : index
      %19 = vector.load %arg5[%c0_12, %c0_13] : memref<8x128xf32, #tpu.memory_space<vmem>>, vector<8x128xf32>
      tpu.vector_store %arg5[%c0_12, %c0_13], %18 {strides = array<i32>} : memref<8x128xf32, #tpu.memory_space<vmem>>, vector<8x128xf32>,
    } else {
    }
    %c0 = arith.constant 0 : index
    %c0_1 = arith.constant 0 : index
    %3 = vector.load %arg2[%c0, %c0_1] : memref<8x128xf32, #tpu.memory_space<vmem>>, vector<8x128xf32>
    %c0_2 = arith.constant 0 : index
    %c0_3 = arith.constant 0 : index
    %4 = vector.load %arg3[%c0_2, %c0_3] : memref<8x128xf32, #tpu.memory_space<vmem>>, vector<8x128xf32>
    %5 = arith.subf %3, %4 : vector<8x128xf32>
    %6 = arith.mulf %5, %5 : vector<8x128xf32>
    %cst = arith.constant 9.99999997E-7 : f32
    %7 = vector.broadcast %cst : f32 to vector<8x128xf32>
    %8 = arith.addf %6, %7 : vector<8x128xf32>
    %9 = math.sqrt %8 : vector<8x128xf32>
    %c0_4 = arith.constant 0 : index
    %c0_5 = arith.constant 0 : index
    %10 = vector.load %arg5[%c0_4, %c0_5] : memref<8x128xf32, #tpu.memory_space<vmem>>, vector<8x128xf32>
    %11 = vector.shape_cast %9 : vector<8x128xf32> to vector<1x8x128xf32>
    %cst_6 = arith.constant dense<0.000000e+00> : vector<8x128xf32>
    %12 = vector.multi_reduction <add>, %11, %cst_6 [0] : vector<1x8x128xf32> to vector<8x128xf32>
    %13 = arith.addf %10, %12 : vector<8x128xf32>
    %c0_7 = arith.constant 0 : index
    %c0_8 = arith.constant 0 : index
    %14 = vector.load %arg5[%c0_7, %c0_8] : memref<8x128xf32, #tpu.memory_space<vmem>>, vector<8x128xf32>
    tpu.vector_store %arg5[%c0_7, %c0_8], %13 {strides = array<i32>} : memref<8x128xf32, #tpu.memory_space<vmem>>, vector<8x128xf32>,
    %c0_i32_9 = arith.constant 0 : i32
    %15 = arith.cmpi eq, %arg1, %c0_i32_9 : i32
    %16 = arith.extui %15 : i1 to i32
    %c0_i32_10 = arith.constant 0 : i32
    %17 = arith.cmpi ne, %16, %c0_i32_10 : i32
    scf.if %17 {
      %c0_11 = arith.constant 0 : index
      %c0_12 = arith.constant 0 : index
      %18 = vector.load %arg5[%c0_11, %c0_12] : memref<8x128xf32, #tpu.memory_space<vmem>>, vector<8x128xf32>
      %c0_13 = arith.constant 0 : index
      %c0_14 = arith.constant 0 : index
      %19 = vector.load %arg4[%c0_13, %c0_14] : memref<8x128xf32, #tpu.memory_space<vmem>>, vector<8x128xf32>
      tpu.vector_store %arg4[%c0_13, %c0_14], %18 {strides = array<i32>} : memref<8x128xf32, #tpu.memory_space<vmem>>, vector<8x128xf32>,
    } else {
    }
    return
  }
  func.func @transform_0(%arg0: i32, %arg1: i32) -> (i32, i32) {
    %c1_i32 = arith.constant 1 : i32
    %0 = arith.muli %arg0, %c1_i32 : i32
    %1 = arith.addi %0, %arg1 : i32
    %c1_i32_0 = arith.constant 1 : i32
    %2 = arith.minsi %1, %c1_i32_0 : i32
    %c0_i32 = arith.constant 0 : i32
    %c0_i32_1 = arith.constant 0 : i32
    return %2, %c0_i32 : i32, i32
  }
  func.func @transform_1(%arg0: i32, %arg1: i32) -> (i32, i32) {
    %c1_i32 = arith.constant 1 : i32
    %0 = arith.muli %arg0, %c1_i32 : i32
    %1 = arith.addi %0, %arg1 : i32
    %c1_i32_0 = arith.constant 1 : i32
    %2 = arith.minsi %1, %c1_i32_0 : i32
    %c0_i32 = arith.constant 0 : i32
    %c0_i32_1 = arith.constant 0 : i32
    return %2, %c0_i32 : i32, i32
  }
  func.func @transform_2(%arg0: i32, %arg1: i32) -> (i32, i32) {
    %c0_i32 = arith.constant 0 : i32
    %c0_i32_0 = arith.constant 0 : i32
    return %arg0, %c0_i32 : i32, i32
  }
}

</mosaic_0001>

<llo_original>
// kernel: tpu_custom_call.1
$region0: #{tpu_custom_call.1}
  #allocation0 [shape = 'u32[]', space=smem, size = 0x4, offset = 0x4, fixed_abs, tag = 'smem constant byte address 0x4 - core index']
  #allocation1 [shape = 'u32[72,128]{1,0:T(1,128)}', space=vmem, size = 0x9000, scoped, tag = 'internal scratch']
  #allocation2 [shape = 'f32[8,128]{1,0:T(8,128)}', space=vmem, size = 0x1000, scoped, tag = 'scratch operand']
  %s0 = inlined_call_operand.hbm [shape: f32[16,128], index: 0, kind: input, shape index: {}]
  %s1 = inlined_call_operand.hbm [shape: f32[16,128], index: 1, kind: input, shape index: {}]
  %s2 = inlined_call_operand.hbm [shape: f32[16,128], index: 2, kind: output, shape index: {}]
  %s3 = sld [smem:[#allocation0]]
  $region57: #{tpu_custom_call.1} parent=0
    _
  %s5 = ssub.s32 1, %s3
  %s6 = scalar_select 0, %s5, %s3
  $region1: #{tpu_custom_call.1} parent=0
    #allocation3 [shape = 'u8[8192]{0}', space=vmem, size = 0x2000, scoped, tag = 'input window, operand 0']
    #allocation4 [shape = 's32[2]{0}', space=sflag, size = 0x8, scoped, tag = 'scoped memory for tpu_custom_call.1']
    #allocation5 [shape = 's32[2]{0}', space=sflag, size = 0x8, scoped, tag = 'scoped memory for tpu_custom_call.1']
    #allocation6 [shape = 'u8[8192]{0}', space=vmem, size = 0x2000, scoped, tag = 'input window, operand 1']
    #allocation7 [shape = 's32[2]{0}', space=sflag, size = 0x8, scoped, tag = 'scoped memory for tpu_custom_call.1']
    #allocation8 [shape = 'u8[8192]{0}', space=vmem, size = 0x2000, scoped, tag = 'output window, operand 0']
    %7 = vsyncpa [#allocation4], 0
    %s8 = scalar_lea.sflag [#allocation4], 1
    %9 = vsyncpa %s8, 0
    %10 = vsyncpa [#allocation7], 0
    %s11 = scalar_lea.sflag [#allocation7], 1
    %12 = vsyncpa %s11, 0
    %13 = vsyncpa [#allocation5], 0
    %s14 = scalar_lea.sflag [#allocation5], 1
    %15 = vsyncpa %s14, 0
    loop: start=0, step=1, limit=4
    $region2: #{tpu_custom_call.1} parent=1 // loop_pre_header
      _
    $region3: #{tpu_custom_call.1} parent=1 // loop_header
      %s17 = sphi 0, %s21
      %p18 = scmp.ge.s32.totalorder %s17, 4
      %s24 = sphi 0, %s36
      %s25 = sphi 0, %s32
      %s26 = sphi 0, %s24
      %s27 = sphi 0, %s25
      %s28 = sphi 0, %s26
      %s29 = sphi 0, %s27
      %s45 = sphi 0, %s47
      %s48 = sphi 0, %s45
      %s49 = sphi 0, %s48
      %s65 = sphi 0, %s49
      %s77 = sphi 0, %s79
      %s80 = sphi 0, %s77
      %s81 = sphi 0, %s80
      %s97 = sphi 0, %s81
      %s103 = sphi 0, %s105
      %s106 = sphi 0, %s103
      %s107 = sphi 0, %s106
      %s123 = sphi 0, %s107
    $region4: #{tpu_custom_call.1} parent=1 // loop_header_branch
      %20 = sbr.rel (%p18) target = $region8
    $region5: #{tpu_custom_call.1} parent=1 // loop_body
      %s22 = ssub.s32 %s17, 1
      %s23 = ssub.s32 %s17, 2
      %s30 = sadd.s32 1, %s25
      %p31 = scmp.ge.s32.totalorder %s30, 1
      %s32 = scalar_select %p31, 0, %s30
      %s33 = sadd.s32 1, %s24
      %s34 = scalar_select %p31, %s33, %s24
      %p35 = scmp.ge.s32.totalorder %s34, 2
      %s36 = scalar_select %p35, 0, %s34
      %s37 = sadd.s32 %s24, %s25
      %p38 = scmp.lt.s32.totalorder %s37, 1
      %s39 = scalar_select %p38, %s37, 1
      %s40 = sadd.s32 %s36, %s32
      %p41 = scmp.lt.s32.totalorder %s40, 1
      %s42 = scalar_select %p41, %s40, 1
      %s43 = ssub.s32 %s39, %s42
      %p44 = scmp.eq.s32.totalorder %s43, 0
      %s46 = sadd.s32 %s45, 1
      %s47 = scalar_select %p44, %s45, %s46
      %p50 = pneg %p44
      %p51 = scmp.eq.s32.totalorder %s17, 1
      %p52 = por %p50, %p51
      %p53 = scmp.ne.s32.totalorder %s45, %s48
      %p54 = scmp.eq.s32.totalorder %s17, 0
      %p55 = por %p53, %p54
      %p56 = scmp.ne.s32.totalorder %s45, %s48
      %p57 = scmp.eq.s32.totalorder %s22, 1
      %p58 = por %p56, %p57
      %p59 = scmp.ne.s32.totalorder %s48, %s49
      %p60 = scmp.eq.s32.totalorder %s22, 0
      %p61 = por %p59, %p60
      %p62 = scmp.ne.s32.totalorder %s48, %s49
      %p63 = scmp.eq.s32.totalorder %s23, 1
      %p64 = por %p62, %p63
      %p66 = scmp.ne.s32.totalorder %s49, %s65
      %p67 = scmp.eq.s32.totalorder %s23, 0
      %p68 = por %p66, %p67
      %s69 = sadd.s32 %s24, %s25
      %p70 = scmp.lt.s32.totalorder %s69, 1
      %s71 = scalar_select %p70, %s69, 1
      %s72 = sadd.s32 %s36, %s32
      %p73 = scmp.lt.s32.totalorder %s72, 1
      %s74 = scalar_select %p73, %s72, 1
      %s75 = ssub.s32 %s71, %s74
      %p76 = scmp.eq.s32.totalorder %s75, 0
      %s78 = sadd.s32 %s77, 1
      %s79 = scalar_select %p76, %s77, %s78
      %p82 = pneg %p76
      %p83 = scmp.eq.s32.totalorder %s17, 1
      %p84 = por %p82, %p83
      %p85 = scmp.ne.s32.totalorder %s77, %s80
      %p86 = scmp.eq.s32.totalorder %s17, 0
      %p87 = por %p85, %p86
      %p88 = scmp.ne.s32.totalorder %s77, %s80
      %p89 = scmp.eq.s32.totalorder %s22, 1
      %p90 = por %p88, %p89
      %p91 = scmp.ne.s32.totalorder %s80, %s81
      %p92 = scmp.eq.s32.totalorder %s22, 0
      %p93 = por %p91, %p92
      %p94 = scmp.ne.s32.totalorder %s80, %s81
      %p95 = scmp.eq.s32.totalorder %s23, 1
      %p96 = por %p94, %p95
      %p98 = scmp.ne.s32.totalorder %s81, %s97
      %p99 = scmp.eq.s32.totalorder %s23, 0
      %p100 = por %p98, %p99
      %s101 = ssub.s32 %s24, %s36
      %p102 = scmp.eq.s32.totalorder %s101, 0
      %s104 = sadd.s32 %s103, 1
      %s105 = scalar_select %p102, %s103, %s104
      %p108 = pneg %p102
      %p109 = scmp.eq.s32.totalorder %s17, 1
      %p110 = por %p108, %p109
      %p111 = scmp.ne.s32.totalorder %s103, %s106
      %p112 = scmp.eq.s32.totalorder %s17, 0
      %p113 = por %p111, %p112
      %p114 = scmp.ne.s32.totalorder %s103, %s106
      %p115 = scmp.eq.s32.totalorder %s22, 1
      %p116 = por %p114, %p115
      %p117 = scmp.ne.s32.totalorder %s106, %s107
      %p118 = scmp.eq.s32.totalorder %s22, 0
      %p119 = por %p117, %p118
      %p120 = scmp.ne.s32.totalorder %s106, %s107
      %p121 = scmp.eq.s32.totalorder %s23, 1
      %p122 = por %p120, %p121
      %p124 = scmp.ne.s32.totalorder %s107, %s123
      %p125 = scmp.eq.s32.totalorder %s23, 0
      %p126 = por %p124, %p125
      %p127 = scmp.le.s32.totalorder 1, %s17
      %p128 = scmp.lt.s32.totalorder %s17, 3
      %p129 = pnand %p127, %p128
      %p130 = pneg %p129
      // Predicated region
      $region9: #{tpu_custom_call.1} parent=5 // pred_check
        _
      $region10: #{tpu_custom_call.1} parent=5 // pred_check_branch
        %132 = sbr.rel (%p129) target = $region12
      $region11: #{tpu_custom_call.1} parent=5 // pred_region
        %s133 = ssub.s32 %s17, 1
      $region12: #{tpu_custom_call.1} parent=5 // pred_fallthru
        _
      %p134 = scmp.lt.s32.totalorder %s17, 2
      // Predicated region
      $region13: #{tpu_custom_call.1} parent=5 // pred_check
        %p135 = pneg %p134
      $region14: #{tpu_custom_call.1} parent=5 // pred_check_branch
        %137 = sbr.rel (%p135) target = $region16
      $region15: #{tpu_custom_call.1} parent=5 // pred_region
        // Predicated region
        $region17: #{tpu_custom_call.1} parent=15 // pred_check
          %p138 = pneg %p55
        $region18: #{tpu_custom_call.1} parent=15 // pred_check_branch
          %140 = sbr.rel (%p138) target = $region20
        $region19: #{tpu_custom_call.1} parent=15 // pred_region
          %s141 = sand.u32 %s45, 1
          %s142 = scalar_lea.sflag [#allocation4], %s141
          %s143 = sand.u32 %s45, 1
          %s144 = smul.addr %s143, 8
          %s145 = scalar_lea.vmem [#allocation3], %s144
          %s146 = sadd.s32 %s24, %s25
          %p147 = scmp.lt.s32.totalorder %s146, 1
          %s148 = scalar_select %p147, %s146, 1
          %150 = vsyncadd %s142, 0
          %s151 = smul.addr %s148, 8
          %s152 = scalar_lea.hbm %s0, %s151
          %s154 = sshll.u32 %s152, 4
          %s155 = int_to_ptr.hbm [resolvable:$true] %s154
          %s156 = sshll.u32 %s145, 4
          %s157 = int_to_ptr.vmem [resolvable:$true] %s156
          %159 = dma.hbm_to_vmem [thread:$0]  %s155, 128, %s157, %s142
        $region20: #{tpu_custom_call.1} parent=15 // pred_fallthru
          _
        // Predicated region
        $region21: #{tpu_custom_call.1} parent=15 // pred_check
          %p160 = pneg %p87
        $region22: #{tpu_custom_call.1} parent=15 // pred_check_branch
          %162 = sbr.rel (%p160) target = $region24
        $region23: #{tpu_custom_call.1} parent=15 // pred_region
          %s163 = sand.u32 %s77, 1
          %s164 = scalar_lea.sflag [#allocation7], %s163
          %s165 = sand.u32 %s77, 1
          %s166 = smul.addr %s165, 8
          %s167 = scalar_lea.vmem [#allocation6], %s166
          %s168 = sadd.s32 %s24, %s25
          %p169 = scmp.lt.s32.totalorder %s168, 1
          %s170 = scalar_select %p169, %s168, 1
          %172 = vsyncadd %s164, 0
          %s173 = smul.addr %s170, 8
          %s174 = scalar_lea.hbm %s1, %s173
          %s176 = sshll.u32 %s174, 4
          %s177 = int_to_ptr.hbm [resolvable:$true] %s176
          %s178 = sshll.u32 %s167, 4
          %s179 = int_to_ptr.vmem [resolvable:$true] %s178
          %181 = dma.hbm_to_vmem [thread:$0]  %s177, 128, %s179, %s164
        $region24: #{tpu_custom_call.1} parent=15 // pred_fallthru
          _
      $region16: #{tpu_custom_call.1} parent=5 // pred_fallthru
        _
      %p182 = scmp.le.s32.totalorder 1, %s17
      %p183 = scmp.lt.s32.totalorder %s17, 3
      %p184 = pnand %p182, %p183
      %p185 = pneg %p184
      // Predicated region
      $region25: #{tpu_custom_call.1} parent=5 // pred_check
        _
      $region26: #{tpu_custom_call.1} parent=5 // pred_check_branch
        %187 = sbr.rel (%p184) target = $region28
      $region27: #{tpu_custom_call.1} parent=5 // pred_region
        %s188 = ssub.s32 %s17, 1
        %s189 = sand.u32 %s48, 1
        %s190 = scalar_lea.sflag [#allocation4], %s189
        %s191 = sand.u32 %s48, 1
        %s192 = smul.addr %s191, 8
        %s193 = scalar_lea.vmem [#allocation3], %s192
        // Predicated region
        $region29: #{tpu_custom_call.1} parent=27 // pred_check
          %p194 = pneg %p61
        $region30: #{tpu_custom_call.1} parent=27 // pred_check_branch
          %196 = sbr.rel (%p194) target = $region32
        $region31: #{tpu_custom_call.1} parent=27 // pred_region
          %198 = dma.done %s190, 128
        $region32: #{tpu_custom_call.1} parent=27 // pred_fallthru
          _
        %s199 = sand.u32 %s80, 1
        %s200 = scalar_lea.sflag [#allocation7], %s199
        %s201 = sand.u32 %s80, 1
        %s202 = smul.addr %s201, 8
        %s203 = scalar_lea.vmem [#allocation6], %s202
        // Predicated region
        $region33: #{tpu_custom_call.1} parent=27 // pred_check
          %p204 = pneg %p93
        $region34: #{tpu_custom_call.1} parent=27 // pred_check_branch
          %206 = sbr.rel (%p204) target = $region36
        $region35: #{tpu_custom_call.1} parent=27 // pred_region
          %208 = dma.done %s200, 128
        $region36: #{tpu_custom_call.1} parent=27 // pred_fallthru
          _
        %s209 = sand.u32 %s48, 1
        %s210 = scalar_lea.sflag [#allocation4], %s209
        %s211 = sand.u32 %s48, 1
        %s212 = smul.addr %s211, 8
        %s213 = scalar_lea.vmem [#allocation3], %s212
        %p214 = pneg %p61
        %p215 = pneg %p58
        %s216 = sand.u32 %s80, 1
        %s217 = scalar_lea.sflag [#allocation7], %s216
        %s218 = sand.u32 %s80, 1
        %s219 = smul.addr %s218, 8
        %s220 = scalar_lea.vmem [#allocation6], %s219
        %p221 = pneg %p93
        %p222 = pneg %p90
        %p223 = pneg %p119
        %p224 = pneg %p116
        %s225 = sand.u32 %s106, 1
        %s226 = scalar_lea.sflag [#allocation5], %s225
        %s227 = sand.u32 %s106, 1
        %s228 = smul.addr %s227, 8
        %s229 = scalar_lea.vmem [#allocation8], %s228
        %s230 = sadd.s32 %s26, %s27
        %p231 = scmp.lt.s32.totalorder %s230, 1
        %s232 = scalar_select %p231, %s230, 1
        %s233 = sadd.s32 %s26, %s27
        %p234 = scmp.lt.s32.totalorder %s233, 1
        %s235 = scalar_select %p234, %s233, 1
        %p236 = scmp.eq.s32.totalorder %s27, 0
        // Predicated region
        $region37: #{tpu_custom_call.1} parent=27 // pred_check
          %p237 = pneg %p236
        $region38: #{tpu_custom_call.1} parent=27 // pred_check_branch
          %239 = sbr.rel (%p237) target = $region40
        $region39: #{tpu_custom_call.1} parent=27 // pred_region
          %240 = vst [vmem:[#allocation2] sm:$0xff] 0.0
        $region40: #{tpu_custom_call.1} parent=27 // pred_fallthru
          _
        %v241 = vld [vmem:[%s193] sm:$0xff]
        %v242 = vld [vmem:[%s203] sm:$0xff]
        %v243 = vsub.f32 %v241, %v242
        %v244 = vmul.f32 %v243, %v243
        %v245 = vadd.f32 %v244, 1e-06
        %v246 = vrsqrt.pop %v245
        %v247 = vmul.f32 %v246, %v245
        %v248 = vmul.f32 %v247, %v246
        %v249 = vmul.f32 0.5, %v248
        %v250 = vsub.f32 1.5, %v249
        %v251 = vmul.f32 %v246, %v250
        %v252 = vmul.f32 %v245, %v251
        %vm253 = vcmp.eq.f32.partialorder %v245, inf
        %v254 = vsel %vm253, %v245, %v252
        %vm255 = vcmp.eq.f32.partialorder %v245, 0.0
        %v256 = vand.u32 %v245, 2147483648
        %v257 = vsel %vm255, %v256, %v254
        %v258 = vld [vmem:[#allocation2] sm:$0xff]
        %v259 = vadd.f32 %v257, 0.0
        %v260 = vadd.f32 %v258, %v259
        %261 = vst [vmem:[#allocation2] sm:$0xff] %v260
        // Predicated region
        $region41: #{tpu_custom_call.1} parent=27 // pred_check
          %p262 = pneg %p236
        $region42: #{tpu_custom_call.1} parent=27 // pred_check_branch
          %264 = sbr.rel (%p262) target = $region44
        $region43: #{tpu_custom_call.1} parent=27 // pred_region
          %v265 = vld [vmem:[#allocation2] sm:$0xff]
          %266 = vst [vmem:[%s229] sm:$0xff] %v265
        $region44: #{tpu_custom_call.1} parent=27 // pred_fallthru
          _
        %s267 = sand.u32 %s106, 1
        %s268 = scalar_lea.sflag [#allocation5], %s267
        %s269 = sand.u32 %s106, 1
        %s270 = smul.addr %s269, 8
        %s271 = scalar_lea.vmem [#allocation8], %s270
        // Predicated region
        $region45: #{tpu_custom_call.1} parent=27 // pred_check
          %p272 = pneg %p116
        $region46: #{tpu_custom_call.1} parent=27 // pred_check_branch
          %274 = sbr.rel (%p272) target = $region48
        $region47: #{tpu_custom_call.1} parent=27 // pred_region
          %276 = vsyncadd %s268, 0
          %s277 = smul.addr %s26, 8
          %s278 = scalar_lea.hbm %s2, %s277
          %s280 = sshll.u32 %s271, 4
          %s281 = int_to_ptr.vmem [resolvable:$true] %s280
          %s282 = sshll.u32 %s278, 4
          %s283 = int_to_ptr.hbm [resolvable:$true] %s282
          %285 = dma.vmem_to_hbm [thread:$0]  %s281, 128, %s283, %s268
        $region48: #{tpu_custom_call.1} parent=27 // pred_fallthru
          _
      $region28: #{tpu_custom_call.1} parent=5 // pred_fallthru
        _
      %p286 = scmp.le.s32.totalorder 2, %s17
      // Predicated region
      $region49: #{tpu_custom_call.1} parent=5 // pred_check
        %p287 = pneg %p286
      $region50: #{tpu_custom_call.1} parent=5 // pred_check_branch
        %289 = sbr.rel (%p287) target = $region52
      $region51: #{tpu_custom_call.1} parent=5 // pred_region
        %s290 = ssub.s32 %s17, 2
        // Predicated region
        $region53: #{tpu_custom_call.1} parent=51 // pred_check
          %p291 = pneg %p122
        $region54: #{tpu_custom_call.1} parent=51 // pred_check_branch
          %293 = sbr.rel (%p291) target = $region56
        $region55: #{tpu_custom_call.1} parent=51 // pred_region
          %s294 = sand.u32 %s107, 1
          %s295 = scalar_lea.sflag [#allocation5], %s294
          %s296 = sand.u32 %s107, 1
          %s297 = smul.addr %s296, 8
          %s298 = scalar_lea.vmem [#allocation8], %s297
          %300 = dma.done %s295, 128
        $region56: #{tpu_custom_call.1} parent=51 // pred_fallthru
          _
      $region52: #{tpu_custom_call.1} parent=5 // pred_fallthru
        _
    $region6: #{tpu_custom_call.1} parent=1 // loop_footer
      %s21 = sadd.s32 1, %s17
    $region7: #{tpu_custom_call.1} parent=1 // loop_footer_branch
      %16 = sbr.rel target = $region3
    $region8: #{tpu_custom_call.1} parent=1 // loop_exit
      _
    %301 = vsyncpa [#allocation4], 1
    %s302 = scalar_lea.sflag [#allocation4], 1
    %303 = vsyncpa %s302, 1
    %304 = vsyncpa [#allocation7], 1
    %s305 = scalar_lea.sflag [#allocation7], 1
    %306 = vsyncpa %s305, 1
    %307 = vsyncpa [#allocation5], 1
    %s308 = scalar_lea.sflag [#allocation5], 1
    %309 = vsyncpa %s308, 1

</llo_original>
